<compile_context>
chip_gen: v7x
topology: tpu7x:2x2x1
jax: 0.10.0
libtpu: 0.0.40
codegen_flags: <defaults>
</compile_context>

<pallas_src>
import functools
import math

import jax
import jax.numpy as jnp
from jax import lax
from jax.experimental import pallas as pl
from jax.experimental.pallas import tpu as pltpu

_INV_SQRT2 = 0.7071067811865476
_SQRT_2_OVER_PI = 0.7978845608028654


# --------------------------------------------------------------------------
# Kernel
# --------------------------------------------------------------------------
def _geglu_kernel(x_ref, wh_ref, wg_ref, bh_ref, bg_ref, o_ref, *accs,
                  approximate_gelu, precision):
    x = x_ref[...]
    # Both projections on the MXU, f32 results.
    h_dot = jnp.dot(x, wh_ref[...], preferred_element_type=jnp.float32,
                    precision=precision)
    g_dot = jnp.dot(x, wg_ref[...], preferred_element_type=jnp.float32,
                    precision=precision)

    def epilogue(h, g):
        # Bias + GELU + gating only once per output tile.
        h = h + bh_ref[...].astype(jnp.float32)
        g = g + bg_ref[...].astype(jnp.float32)
        if approximate_gelu:
            # tanh approximation -> transcendental on the (otherwise idle) EUP.
            gelu_g = 0.5 * g * (1.0 + jnp.tanh(
                _SQRT_2_OVER_PI * (g + 0.044715 * g * g * g)))
        else:
            # Exact erf-based GELU, matching torch.nn.functional.gelu default.
            gelu_g = 0.5 * g * (1.0 + lax.erf(g * _INV_SQRT2))
        o_ref[...] = (h * gelu_g).astype(o_ref.dtype)

    if not accs:
        # Single K step: no accumulator round trip, write the tile directly.
        epilogue(h_dot, g_dot)
        return

    h_acc, g_acc = accs
    k = pl.program_id(2)

    @pl.when(k == 0)
    def _first():
        # Direct assign (no zero-init sweep + reload).
        h_acc[...] = h_dot
        g_acc[...] = g_dot

    @pl.when(k > 0)
    def _accumulate():
        h_acc[...] += h_dot
        g_acc[...] += g_dot

    @pl.when(k == pl.num_programs(2) - 1)
    def _last():
        epilogue(h_acc[...], g_acc[...])


# --------------------------------------------------------------------------
# Tile / hardware heuristics
# --------------------------------------------------------------------------
def _round_up(x, n):
    return (x + n - 1) // n * n


def _pick_tile(dim, candidates):
    for t in candidates:
        if t is not None and 0 < t <= dim and dim % t == 0:
            return t
    return dim  # fall back to the full (untiled) dimension


def _largest_dividing_tile(total, target):
    # `total` is a multiple of 128; return the largest multiple of 128
    # <= target that divides it (128 always qualifies).
    t = max((min(target, total) // 128) * 128, 128)
    while t > 128 and total % t:
        t -= 128
    return t


def _chip_generation():
    try:
        kind = jax.devices()[0].device_kind.lower()
    except Exception:
        return "unknown"
    if "v5 lite" in kind or "v5lite" in kind or "v5e" in kind:
        return "v5e"
    if "v6" in kind:
        return "v6e"
    if "v7" in kind or "7x" in kind:
        return "v7x"
    return "unknown"


def _vmem_capacity_bytes(gen):
    try:
        cap = int(pltpu.get_tpu_info().vmem_capacity_bytes)
        if cap > 0:
            return cap
    except Exception:
        pass
    return (64 if gen == "v7x" else 128) * 1024 * 1024


def _default_tiles(gen):
    # bf16 per-tile arithmetic intensity ~ 2*tm*tn / (tm + 2*tn) flops/byte.
    if gen == "v6e":
        return 1024, 1024, 1024   # ~683 fl/B ~ v6e break-even (918 TF/s / 1.35 TB/s)
    if gen == "v5e":
        return 512, 512, 1024     # ~341 fl/B vs ~240 needed on v5e
    if gen == "v7x":
        return 512, 512, 1024     # ~341 fl/B vs ~310 needed; keeps VMEM headroom
    return 512, 512, 512


def _resolve_approximate_gelu(flag, gen):
    if flag is None:
        # v5e: exact erf lowers to a long VALU polynomial (no bf16 VPU);
        # route the transcendental through the idle EUP instead.
        return gen == "v5e"
    return bool(flag)


# --------------------------------------------------------------------------
# Wrapper
# --------------------------------------------------------------------------
def geglu(x, w, b, *, tm=None, tn=None, tk=None, approximate_gelu=None,
          precision=None):
    """GEGLU forward.

    x: (..., dim_in)
    w: (dim_in, 2*dim_out)   (transposed PyTorch nn.Linear weight; columns
                              [0:dim_out) = hidden half, [dim_out:) = gate
                              half, matching .chunk(2, dim=-1))
    b: (2*dim_out,)
    returns: (..., dim_out)
    """
    *lead, dim_in = x.shape
    assert w.shape[0] == dim_in and w.shape[1] % 2 == 0
    dim_out = w.shape[1] // 2

    gen = _chip_generation()
    d_tm, d_tn, d_tk = _default_tiles(gen)
    tm = d_tm if tm is None else tm
    tn = d_tn if tn is None else tn
    tk = d_tk if tk is None else tk
    approximate_gelu = _resolve_approximate_gelu(approximate_gelu, gen)

    x2d = x.reshape(-1, dim_in)
    m = x2d.shape[0]

    # Row (M) tiling: pad the token count to at most the next 128-row boundary
    # (not to a tm boundary), then pick the largest row tile <= tm dividing it.
    row_align = 8 if x.dtype == jnp.float32 else 16
    if m <= tm:
        tm = _round_up(m, row_align)
        m_pad = tm
    else:
        m_pad = _round_up(m, 128)
        tm = _largest_dividing_tile(m_pad, tm)
    if m_pad != m:
        x2d = jnp.pad(x2d, ((0, m_pad - m), (0, 0)))

    # Feature (N) and contraction (K) tiles; must divide the dims.
    tn = _pick_tile(dim_out, (tn, 512, 256, 128))
    tk = _pick_tile(dim_in, (tk, 512, 256, 128))

    # v7x megacore: make sure there are >= 2 independent (M, N) output blocks
    # so both TensorCores get work; shrink tn if necessary.
    if gen == "v7x":
        while ((m_pad // tm) * (dim_out // tn) < 2 and tn % 256 == 0):
            tn //= 2

    # VMEM working set (double-buffered tiles + f32 accumulators); shrink
    # tiles if a configuration would not fit the per-core budget.
    bx, bw, bo, bb = (x2d.dtype.itemsize, w.dtype.itemsize,
                      jnp.dtype(x.dtype).itemsize, b.dtype.itemsize)

    def working_set(tm_, tn_, tk_):
        return (2 * tm_ * tk_ * bx            # x tile
                + 2 * 2 * tk_ * tn_ * bw      # hidden + gate weight tiles
                + 2 * 2 * 8 * tn_ * bb        # bias tiles (sublane-padded)
                + 2 * tm_ * tn_ * bo          # output tile
                + 2 * tm_ * tn_ * 4)          # f32 accumulators

    vmem_cap = _vmem_capacity_bytes(gen)
    budget = int(vmem_cap * 0.7)
    for _ in range(16):
        if working_set(tm, tn, tk) <= budget:
            break
        if tk % 256 == 0:
            tk //= 2
        elif tn % 256 == 0:
            tn //= 2
        elif tm % 256 == 0:
            tm //= 2
        else:
            break

    n_tiles = dim_out // tn
    k_tiles = dim_in // tk
    grid = (m_pad // tm, n_tiles, k_tiles)

    b2d = b.reshape(1, 2 * dim_out)

    # Only allocate accumulators when the K reduction actually spans >1 step.
    scratch = ([pltpu.VMEM((tm, tn), jnp.float32),
                pltpu.VMEM((tm, tn), jnp.float32)] if k_tiles > 1 else [])

    # Working-set-derived limit (with headroom), never the full physical VMEM.
    vmem_limit = int(min(max(working_set(tm, tn, tk) * 5 // 4, 32 << 20),
                         vmem_cap * 3 // 4))

    kernel = functools.partial(_geglu_kernel,
                               approximate_gelu=approximate_gelu,
                               precision=precision)

    out = pl.pallas_call(
        kernel,
        out_shape=jax.ShapeDtypeStruct((m_pad, dim_out), x.dtype),
        grid_spec=pltpu.PrefetchScalarGridSpec(
            num_scalar_prefetch=0,
            grid=grid,
            in_specs=[
                # x tile
                pl.BlockSpec((tm, tk), lambda i, j, k: (i, k)),
                # hidden half of the (single) weight: columns [j*tn, (j+1)*tn)
                pl.BlockSpec((tk, tn), lambda i, j, k: (k, j)),
                # gate half of the SAME weight: columns offset by dim_out
                pl.BlockSpec((tk, tn), lambda i, j, k: (k, j + n_tiles)),
                # bias halves (same array passed twice, different col offsets)
                pl.BlockSpec((1, tn), lambda i, j, k: (0, j)),
                pl.BlockSpec((1, tn), lambda i, j, k: (0, j + n_tiles)),
            ],
            out_specs=pl.BlockSpec((tm, tn), lambda i, j, k: (i, j)),
            scratch_shapes=scratch,
        ),
        compiler_params=pltpu.CompilerParams(
            dimension_semantics=("parallel", "parallel", "arbitrary"),
            vmem_limit_bytes=vmem_limit,
        ),
    )(x2d, w, w, b2d, b2d)

    if m_pad != m:
        out = out[:m]
    return out.reshape(*lead, dim_out)


def geglu_ref(x, w, b, *, approximate=False):
    dim_out = w.shape[1] // 2
    proj = jnp.einsum("...i,io->...o", x, w) + b
    h, g = proj[..., :dim_out], proj[..., dim_out:]
    return h * jax.nn.gelu(g, approximate=approximate)


if __name__ == "__main__":
    key = jax.random.PRNGKey(0)
    batch, seq, dim_in, dim_out = 2, 8, 128, 128

    kx, kw, kb = jax.random.split(key, 3)
    x = jax.random.normal(kx, (batch, seq, dim_in), dtype=jnp.float32)
    # Deterministic parameter init (mirrors nn.Linear(dim_in, 2*dim_out) shapes).
    bound = 1.0 / math.sqrt(dim_in)
    w = jax.random.uniform(kw, (dim_in, 2 * dim_out), minval=-bound, maxval=bound,
                           dtype=jnp.float32)
    b = jax.random.uniform(kb, (2 * dim_out,), minval=-bound, maxval=bound,
                           dtype=jnp.float32)

    # The kernel's GELU flavor is generation-dependent (tanh on v5e); build
    # the reference with the same flavor.
    approx = _resolve_approximate_gelu(None, _chip_generation())

    out = jax.block_until_ready(geglu(x, w, b))
    ref = geglu_ref(x, w, b, approximate=approx)
    assert out.shape == (batch, seq, dim_out)
    assert jnp.allclose(out, ref, atol=1e-4, rtol=1e-4), "mismatch vs reference"

    # Ragged token count exercises the pad/slice path.
    x2 = jax.random.normal(kx, (3, 5, dim_in), dtype=jnp.float32)
    out2 = jax.block_until_ready(geglu(x2, w, b))
    ref2 = geglu_ref(x2, w, b, approximate=approx)
    assert out2.shape == (3, 5, dim_out)
    assert jnp.allclose(out2, ref2, atol=1e-4, rtol=1e-4), "ragged mismatch"

    # Multi-K-step path (first-step assign + accumulate + epilogue):
    # dim_in=256 with tk=128 forces 2 K steps.
    dim_in3 = 256
    x3 = jax.random.normal(kx, (2, 8, dim_in3), dtype=jnp.float32)
    w3 = jax.random.uniform(kw, (dim_in3, 2 * dim_out), minval=-bound,
                            maxval=bound, dtype=jnp.float32)
    out3 = jax.block_until_ready(geglu(x3, w3, b, tk=128))
    ref3 = geglu_ref(x3, w3, b, approximate=approx)
    assert out3.shape == (2, 8, dim_out)
    assert jnp.allclose(out3, ref3, atol=1e-4, rtol=1e-4), "multi-K mismatch"

    print("KERNEL_OK")
</pallas_src>

<mosaic_0001>
module attributes {stable_mosaic.version = 11 : i64} {
  func.func @_geglu_kernel(%arg0: i32, %arg1: i32, %arg2: i32, %arg3: memref<16x128xf32, #tpu.memory_space<vmem>>, %arg4: memref<128x128xf32, #tpu.memory_space<vmem>>, %arg5: memref<128x128xf32, #tpu.memory_space<vmem>>, %arg6: memref<1x128xf32, #tpu.memory_space<vmem>>, %arg7: memref<1x128xf32, #tpu.memory_space<vmem>>, %arg8: memref<16x128xf32, #tpu.memory_space<vmem>>) attributes {dimension_semantics = [#tpu.dimension_semantics<parallel>, #tpu.dimension_semantics<parallel>, #tpu.dimension_semantics<arbitrary>], iteration_bounds = array<i64: 1, 1, 1>, scalar_prefetch = 0 : i64, scratch_operands = 0 : i64, tpu.core_type = #tpu.core_type<tc>, window_params = [{transform_indices = @transform_0, window_bounds = array<i64: 16, 128>}, {transform_indices = @transform_1, window_bounds = array<i64: 128, 128>}, {transform_indices = @transform_2, window_bounds = array<i64: 128, 128>}, {transform_indices = @transform_3, window_bounds = array<i64: 1, 128>}, {transform_indices = @transform_4, window_bounds = array<i64: 1, 128>}, {transform_indices = @transform_5, window_bounds = array<i64: 16, 128>}]} {
    %c0 = arith.constant 0 : index
    %c0_0 = arith.constant 0 : index
    %0 = vector.load %arg3[%c0, %c0_0] : memref<16x128xf32, #tpu.memory_space<vmem>>, vector<16x128xf32>
    %c0_1 = arith.constant 0 : index
    %c0_2 = arith.constant 0 : index
    %1 = vector.load %arg4[%c0_1, %c0_2] : memref<128x128xf32, #tpu.memory_space<vmem>>, vector<128x128xf32>
    %cst = arith.constant dense<0.000000e+00> : vector<16x128xf32>
    %2 = tpu.matmul %0, %1, %cst {dimension_numbers = #tpu.dot_dimension_numbers<[1], [0], [0], [1], [0, 0, 1, 1], [], []>} : vector<16x128xf32>, vector<128x128xf32>, vector<16x128xf32> -> vector<16x128xf32>
    %c0_3 = arith.constant 0 : index
    %c0_4 = arith.constant 0 : index
    %3 = vector.load %arg5[%c0_3, %c0_4] : memref<128x128xf32, #tpu.memory_space<vmem>>, vector<128x128xf32>
    %cst_5 = arith.constant dense<0.000000e+00> : vector<16x128xf32>
    %4 = tpu.matmul %0, %3, %cst_5 {dimension_numbers = #tpu.dot_dimension_numbers<[1], [0], [0], [1], [0, 0, 1, 1], [], []>} : vector<16x128xf32>, vector<128x128xf32>, vector<16x128xf32> -> vector<16x128xf32>
    %c0_6 = arith.constant 0 : index
    %c0_7 = arith.constant 0 : index
    %5 = vector.load %arg6[%c0_6, %c0_7] : memref<1x128xf32, #tpu.memory_space<vmem>>, vector<1x128xf32>
    %6 = vector.broadcast %5 : vector<1x128xf32> to vector<16x128xf32>
    %7 = arith.addf %2, %6 : vector<16x128xf32>
    %c0_8 = arith.constant 0 : index
    %c0_9 = arith.constant 0 : index
    %8 = vector.load %arg7[%c0_8, %c0_9] : memref<1x128xf32, #tpu.memory_space<vmem>>, vector<1x128xf32>
    %9 = vector.broadcast %8 : vector<1x128xf32> to vector<16x128xf32>
    %10 = arith.addf %4, %9 : vector<16x128xf32>
    %cst_10 = arith.constant 5.000000e-01 : f32
    %11 = vector.broadcast %cst_10 : f32 to vector<16x128xf32>
    %12 = arith.mulf %11, %10 : vector<16x128xf32>
    %cst_11 = arith.constant 0.707106769 : f32
    %13 = vector.broadcast %cst_11 : f32 to vector<16x128xf32>
    %14 = arith.mulf %10, %13 : vector<16x128xf32>
    %15 = math.erf %14 : vector<16x128xf32>
    %cst_12 = arith.constant 1.000000e+00 : f32
    %16 = vector.broadcast %cst_12 : f32 to vector<16x128xf32>
    %17 = arith.addf %16, %15 : vector<16x128xf32>
    %18 = arith.mulf %12, %17 : vector<16x128xf32>
    %19 = arith.mulf %7, %18 : vector<16x128xf32>
    %c0_13 = arith.constant 0 : index
    %c0_14 = arith.constant 0 : index
    %20 = vector.load %arg8[%c0_13, %c0_14] : memref<16x128xf32, #tpu.memory_space<vmem>>, vector<16x128xf32>
    tpu.vector_store %arg8[%c0_13, %c0_14], %19 {strides = array<i32>} : memref<16x128xf32, #tpu.memory_space<vmem>>, vector<16x128xf32>,
    return
  }
  func.func @transform_0(%arg0: i32, %arg1: i32, %arg2: i32) -> (i32, i32) {
    %c0_i32 = arith.constant 0 : i32
    return %arg0, %arg2 : i32, i32
  }
  func.func @transform_1(%arg0: i32, %arg1: i32, %arg2: i32) -> (i32, i32) {
    %c0_i32 = arith.constant 0 : i32
    return %arg2, %arg1 : i32, i32
  }
  func.func @transform_2(%arg0: i32, %arg1: i32, %arg2: i32) -> (i32, i32) {
    %c1_i32 = arith.constant 1 : i32
    %0 = arith.addi %arg1, %c1_i32 : i32
    %c0_i32 = arith.constant 0 : i32
    return %arg2, %0 : i32, i32
  }
  func.func @transform_3(%arg0: i32, %arg1: i32, %arg2: i32) -> (i32, i32) {
    %c0_i32 = arith.constant 0 : i32
    %c0_i32_0 = arith.constant 0 : i32
    return %c0_i32, %arg1 : i32, i32
  }
  func.func @transform_4(%arg0: i32, %arg1: i32, %arg2: i32) -> (i32, i32) {
    %c1_i32 = arith.constant 1 : i32
    %0 = arith.addi %arg1, %c1_i32 : i32
    %c0_i32 = arith.constant 0 : i32
    %c0_i32_0 = arith.constant 0 : i32
    return %c0_i32, %0 : i32, i32
  }
  func.func @transform_5(%arg0: i32, %arg1: i32, %arg2: i32) -> (i32, i32) {
    %c0_i32 = arith.constant 0 : i32
    return %arg0, %arg1 : i32, i32
  }
}

</mosaic_0001>

<llo_original>
// kernel: tpu_custom_call.1
$region0: #{tpu_custom_call.1}
  #allocation0 [shape = 'u32[]', space=smem, size = 0x4, offset = 0x4, fixed_abs, tag = 'smem constant byte address 0x4 - core index']
  #allocation1 [shape = 'u32[144,128]{1,0:T(1,128)}', space=vmem, size = 0x12000, scoped, tag = 'internal scratch']
  %s0 = inlined_call_operand.hbm [shape: f32[16,128], index: 0, kind: input, shape index: {}]
  %s1 = inlined_call_operand.hbm [shape: f32[128,256], index: 1, kind: input, shape index: {}]
  %s2 = inlined_call_operand.hbm [shape: f32[128,256], index: 2, kind: input, shape index: {}]
  %s3 = inlined_call_operand.vmem [shape: f32[1,256], index: 3, kind: input, shape index: {}]
  %s4 = inlined_call_operand.vmem [shape: f32[1,256], index: 4, kind: input, shape index: {}]
  %s5 = inlined_call_operand.hbm [shape: f32[16,128], index: 5, kind: output, shape index: {}]
  %s6 = sld [smem:[#allocation0]]
  $region42: #{tpu_custom_call.1} parent=0
    _
  %s8 = ssub.s32 1, %s6
  %s9 = scalar_select 0, %s8, %s6
  $region1: #{tpu_custom_call.1} parent=0
    #allocation2 [shape = 'u8[8192]{0}', space=vmem, size = 0x2000, scoped, tag = 'input window, operand 0, single buffered']
    #allocation3 [shape = 's32[1]{0}', space=sflag, size = 0x4, scoped, tag = 'scoped memory for tpu_custom_call.1']
    #allocation4 [shape = 's32[1]{0}', space=sflag, size = 0x4, scoped, tag = 'scoped memory for tpu_custom_call.1']
    #allocation5 [shape = 'u8[65536]{0}', space=vmem, size = 0x10000, scoped, tag = 'input window, operand 1, single buffered']
    #allocation6 [shape = 's32[1]{0}', space=sflag, size = 0x4, scoped, tag = 'scoped memory for tpu_custom_call.1']
    #allocation7 [shape = 'u8[65536]{0}', space=vmem, size = 0x10000, scoped, tag = 'input window, operand 2, single buffered']
    #allocation8 [shape = 'u8[8192]{0}', space=vmem, size = 0x2000, scoped, tag = 'output window, operand 0, single buffered']
    %10 = vsyncpa [#allocation3], 0
    %11 = vsyncpa [#allocation6], 0
    %12 = vsyncpa [#allocation4], 0
    // Predicated region
    $region2: #{tpu_custom_call.1} parent=1 // pred_check
      _
    $region3: #{tpu_custom_call.1} parent=1 // pred_check_branch
      %14 = sbr.rel (0) target = $region5
    $region4: #{tpu_custom_call.1} parent=1 // pred_region
      %s16 = ssub.s32 256, 256
      %17 = vsyncadd [#allocation3], %s16
      %s18 = sshll.u32 [#allocation2], 4
      %s19 = int_to_ptr.vmem [resolvable:$true] %s18
      %24 = dma.hbm_to_vmem [thread:$0]  %s0, 256, %s19, [#allocation3], 128, 128, 8
    $region5: #{tpu_custom_call.1} parent=1 // pred_fallthru
      _
    // Predicated region
    $region6: #{tpu_custom_call.1} parent=1 // pred_check
      _
    $region7: #{tpu_custom_call.1} parent=1 // pred_check_branch
      %26 = sbr.rel (0) target = $region9
    $region8: #{tpu_custom_call.1} parent=1 // pred_region
      %s28 = ssub.s32 2048, 2048
      %29 = vsyncadd [#allocation6], %s28
      %s30 = sshll.u32 [#allocation5], 4
      %s31 = int_to_ptr.vmem [resolvable:$true] %s30
      %36 = dma.hbm_to_vmem [thread:$0]  %s1, 2048, %s31, [#allocation6], 256, 128, 8
    $region9: #{tpu_custom_call.1} parent=1 // pred_fallthru
      _
    // Predicated region
    $region10: #{tpu_custom_call.1} parent=1 // pred_check
      _
    $region11: #{tpu_custom_call.1} parent=1 // pred_check_branch
      %38 = sbr.rel (0) target = $region13
    $region12: #{tpu_custom_call.1} parent=1 // pred_region
      %s39 = sadd.s32 0, 1
      %s41 = ssub.s32 2048, 2048
      %42 = vsyncadd [#allocation6], %s41
      %s43 = smul.addr %s39, 128
      %s44 = scalar_lea.hbm %s2, %s43
      %s45 = sshll.u32 [#allocation7], 4
      %s46 = int_to_ptr.vmem [resolvable:$true] %s45
      %51 = dma.hbm_to_vmem [thread:$0]  %s44, 2048, %s46, [#allocation6], 256, 128, 8
    $region13: #{tpu_custom_call.1} parent=1 // pred_fallthru
      _
    // Predicated region
    $region14: #{tpu_custom_call.1} parent=1 // pred_check
      _
    $region15: #{tpu_custom_call.1} parent=1 // pred_check_branch
      %53 = sbr.rel (0) target = $region17
    $region16: #{tpu_custom_call.1} parent=1 // pred_region
      _
    $region17: #{tpu_custom_call.1} parent=1 // pred_fallthru
      _
    // Predicated region
    $region18: #{tpu_custom_call.1} parent=1 // pred_check
      _
    $region19: #{tpu_custom_call.1} parent=1 // pred_check_branch
      %55 = sbr.rel (0) target = $region21
    $region20: #{tpu_custom_call.1} parent=1 // pred_region
      %s56 = sadd.s32 0, 1
      %p57 = scmp.lt.s32.totalorder %s56, 1
      %s58 = scalar_select %p57, %s56, 1
      %s59 = scalar_lea.vmem %s4, %s58
      %s60 = sadd.s32 0, 1
    $region21: #{tpu_custom_call.1} parent=1 // pred_fallthru
      _
    // Predicated region
    $region22: #{tpu_custom_call.1} parent=1 // pred_check
      _
    $region23: #{tpu_custom_call.1} parent=1 // pred_check_branch
      %62 = sbr.rel (0) target = $region25
    $region24: #{tpu_custom_call.1} parent=1 // pred_region
      %63 = dma.done [#allocation3], 256
    $region25: #{tpu_custom_call.1} parent=1 // pred_fallthru
      _
    // Predicated region
    $region26: #{tpu_custom_call.1} parent=1 // pred_check
      _
    $region27: #{tpu_custom_call.1} parent=1 // pred_check_branch
      %65 = sbr.rel (0) target = $region29
    $region28: #{tpu_custom_call.1} parent=1 // pred_region
      %66 = dma.done [#allocation6], 2048
    $region29: #{tpu_custom_call.1} parent=1 // pred_fallthru
      _
    // Predicated region
    $region30: #{tpu_custom_call.1} parent=1 // pred_check
      _
    $region31: #{tpu_custom_call.1} parent=1 // pred_check_branch
      %68 = sbr.rel (0) target = $region33
    $region32: #{tpu_custom_call.1} parent=1 // pred_region
      %69 = dma.done [#allocation6], 2048
    $region33: #{tpu_custom_call.1} parent=1 // pred_fallthru
      _
    %s70 = sadd.s32 0, 1
    %p71 = scmp.lt.s32.totalorder %s70, 1
    %s72 = scalar_select %p71, %s70, 1
    %s73 = scalar_lea.vmem %s4, %s72
    %s74 = sadd.s32 0, 1
    %s75 = sadd.s32 0, 1
    %p76 = scmp.lt.s32.totalorder %s75, 1
    %s77 = scalar_select %p76, %s75, 1
    %s78 = scalar_lea.vmem %s4, %s77
    %s79 = sadd.s32 0, 1
    %v80 = vld [vmem:[#allocation2] sm:$0xff]
    %v81 = vld [vmem:[#allocation2 + $0x8] sm:$0xff]
    %v82 = vld [vmem:[#allocation5] sm:$0xff]
    %v83 = vld [vmem:[#allocation5 + $0x8] sm:$0xff]
    %v84 = vld [vmem:[#allocation5 + $0x10] sm:$0xff]
    %v85 = vld [vmem:[#allocation5 + $0x18] sm:$0xff]
    %v86 = vld [vmem:[#allocation5 + $0x20] sm:$0xff]
    %v87 = vld [vmem:[#allocation5 + $0x28] sm:$0xff]
    %v88 = vld [vmem:[#allocation5 + $0x30] sm:$0xff]
    %v89 = vld [vmem:[#allocation5 + $0x38] sm:$0xff]
    %v90 = vld [vmem:[#allocation5 + $0x40] sm:$0xff]
    %v91 = vld [vmem:[#allocation5 + $0x48] sm:$0xff]
    %v92 = vld [vmem:[#allocation5 + $0x50] sm:$0xff]
    %v93 = vld [vmem:[#allocation5 + $0x58] sm:$0xff]
    %v94 = vld [vmem:[#allocation5 + $0x60] sm:$0xff]
    %v95 = vld [vmem:[#allocation5 + $0x68] sm:$0xff]
    %v96 = vld [vmem:[#allocation5 + $0x70] sm:$0xff]
    %v97 = vld [vmem:[#allocation5 + $0x78] sm:$0xff]
    %v98 = vld [vmem:[#allocation7] sm:$0xff]
    %v99 = vld [vmem:[#allocation7 + $0x8] sm:$0xff]
    %v100 = vld [vmem:[#allocation7 + $0x10] sm:$0xff]
    %v101 = vld [vmem:[#allocation7 + $0x18] sm:$0xff]
    %v102 = vld [vmem:[#allocation7 + $0x20] sm:$0xff]
    %v103 = vld [vmem:[#allocation7 + $0x28] sm:$0xff]
    %v104 = vld [vmem:[#allocation7 + $0x30] sm:$0xff]
    %v105 = vld [vmem:[#allocation7 + $0x38] sm:$0xff]
    %v106 = vld [vmem:[#allocation7 + $0x40] sm:$0xff]
    %v107 = vld [vmem:[#allocation7 + $0x48] sm:$0xff]
    %v108 = vld [vmem:[#allocation7 + $0x50] sm:$0xff]
    %v109 = vld [vmem:[#allocation7 + $0x58] sm:$0xff]
    %v110 = vld [vmem:[#allocation7 + $0x60] sm:$0xff]
    %v111 = vld [vmem:[#allocation7 + $0x68] sm:$0xff]
    %v112 = vld [vmem:[#allocation7 + $0x70] sm:$0xff]
    %v113 = vld [vmem:[#allocation7 + $0x78] sm:$0xff]
    %v114 = vld [vmem:[%s3] sm:$0x1]
    %v116 = vlaneseq
    %v117 = vshrl.u32 %v116, 7
    %v118 = vsub.s32 0, %v117
    %v119 = vrot.slane %v114, %v118
    %121 = vmatprep.subr.mxu0 0.0
    %122 = vmatpush1.msra.mxu0 %v82
    %123 = vmatprep.subr.mxu0 0.0
    %124 = vmatpush1.msra.mxu0 %v83
    %125 = vmatprep.subr.mxu0 0.0
    %126 = vmatpush1.msra.mxu0 %v84
    %127 = vmatprep.subr.mxu0 0.0
    %128 = vmatpush1.msra.mxu0 %v85
    %129 = vmatprep.subr.mxu0 0.0
    %130 = vmatpush1.msra.mxu0 %v86
    %131 = vmatprep.subr.mxu0 0.0
    %132 = vmatpush1.msra.mxu0 %v87
    %133 = vmatprep.subr.mxu0 0.0
    %134 = vmatpush1.msra.mxu0 %v88
    %135 = vmatprep.subr.mxu0 0.0
    %136 = vmatpush1.msra.mxu0 %v89
    %137 = vmatprep.subr.mxu0 0.0
    %138 = vmatpush1.msra.mxu0 %v90
    %139 = vmatprep.subr.mxu0 0.0
    %140 = vmatpush1.msra.mxu0 %v91
    %141 = vmatprep.subr.mxu0 0.0
    %142 = vmatpush1.msra.mxu0 %v92
    %143 = vmatprep.subr.mxu0 0.0
    %144 = vmatpush1.msra.mxu0 %v93
    %145 = vmatprep.subr.mxu0 0.0
    %146 = vmatpush1.msra.mxu0 %v94
    %147 = vmatprep.subr.mxu0 0.0
    %148 = vmatpush1.msra.mxu0 %v95
    %149 = vmatprep.subr.mxu0 0.0
    %150 = vmatpush1.msra.mxu0 %v96
    %151 = vmatprep.subr.mxu0 0.0
    %152 = vmatpush1.msra.mxu0 %v97
    %153 = vmatprep.subr.mxu0 0.0
    %154 = vmatpush1.msra.mxu0 0.0
    %155 = vmatprep.subr.mxu0 0.0
    %156 = vmatpush1.msra.mxu0 0.0
    %157 = vmatprep.subr.mxu0 0.0
    %158 = vmatpush1.msra.mxu0 0.0
    %159 = vmatprep.subr.mxu0 0.0
    %160 = vmatpush1.msra.mxu0 0.0
    %161 = vmatprep.subr.mxu0 0.0
    %162 = vmatpush1.msra.mxu0 0.0
    %163 = vmatprep.subr.mxu0 0.0
    %164 = vmatpush1.msra.mxu0 0.0
    %165 = vmatprep.subr.mxu0 0.0
    %166 = vmatpush1.msra.mxu0 0.0
    %167 = vmatprep.subr.mxu0 0.0
    %168 = vmatpush1.msra.mxu0 0.0
    %169 = vmatprep.subr.mxu0 0.0
    %170 = vmatpush1.msra.mxu0 0.0
    %171 = vmatprep.subr.mxu0 0.0
    %172 = vmatpush1.msra.mxu0 0.0
    %173 = vmatprep.subr.mxu0 0.0
    %174 = vmatpush1.msra.mxu0 0.0
    %175 = vmatprep.subr.mxu0 0.0
    %176 = vmatpush1.msra.mxu0 0.0
    %177 = vmatprep.subr.mxu0 0.0
    %178 = vmatpush1.msra.mxu0 0.0
    %179 = vmatprep.subr.mxu0 0.0
    %180 = vmatpush1.msra.mxu0 0.0
    %181 = vmatprep.subr.mxu0 0.0
    %182 = vmatpush1.msra.mxu0 0.0
    %183 = vmatprep.subr.mxu0 0.0
    %184 = vmatpush1.msra.mxu0 0.0
    %185 = vmatprep.mubr.f32.mxu0 0.0
    %186 = vmatmul.mubr.f32.gmra.mrb[0].mxu0 %v80
    %v187 = vpop.f32.mrb[0].mxu0
    %v188 = vadd.f32 %v119, %v187
    %v189 = vpop.f32.mrb[0].mxu0
    %190 = vmatprep.mubr.f32.mxu0 0.0
    %191 = vmatmul.mubr.f32.gmra.mrb[0].mxu0 %v81
    %v192 = vpop.f32.mrb[0].mxu0
    %v193 = vadd.f32 %v119, %v192
    %v194 = vpop.f32.mrb[0].mxu0
    %195 = vdwg.mxu0
    %v196 = vld [vmem:[%s78] sm:$0x1]
    %v198 = vlaneseq
    %v199 = vshrl.u32 %v198, 7
    %v200 = vsub.s32 0, %v199
    %v201 = vrot.slane %v196, %v200
    %203 = vmatprep.subr.mxu0 0.0
    %204 = vmatpush1.msra.mxu0 %v98
    %205 = vmatprep.subr.mxu0 0.0
    %206 = vmatpush1.msra.mxu0 %v99
    %207 = vmatprep.subr.mxu0 0.0
    %208 = vmatpush1.msra.mxu0 %v100
    %209 = vmatprep.subr.mxu0 0.0
    %210 = vmatpush1.msra.mxu0 %v101
    %211 = vmatprep.subr.mxu0 0.0
    %212 = vmatpush1.msra.mxu0 %v102
    %213 = vmatprep.subr.mxu0 0.0
    %214 = vmatpush1.msra.mxu0 %v103
    %215 = vmatprep.subr.mxu0 0.0
    %216 = vmatpush1.msra.mxu0 %v104
    %217 = vmatprep.subr.mxu0 0.0
    %218 = vmatpush1.msra.mxu0 %v105
    %219 = vmatprep.subr.mxu0 0.0
    %220 = vmatpush1.msra.mxu0 %v106
    %221 = vmatprep.subr.mxu0 0.0
    %222 = vmatpush1.msra.mxu0 %v107
    %223 = vmatprep.subr.mxu0 0.0
    %224 = vmatpush1.msra.mxu0 %v108
    %225 = vmatprep.subr.mxu0 0.0
    %226 = vmatpush1.msra.mxu0 %v109
    %227 = vmatprep.subr.mxu0 0.0
    %228 = vmatpush1.msra.mxu0 %v110
    %229 = vmatprep.subr.mxu0 0.0
    %230 = vmatpush1.msra.mxu0 %v111
    %231 = vmatprep.subr.mxu0 0.0
    %232 = vmatpush1.msra.mxu0 %v112
    %233 = vmatprep.subr.mxu0 0.0
    %234 = vmatpush1.msra.mxu0 %v113
    %235 = vmatprep.subr.mxu0 0.0
    %236 = vmatpush1.msra.mxu0 0.0
    %237 = vmatprep.subr.mxu0 0.0
    %238 = vmatpush1.msra.mxu0 0.0
    %239 = vmatprep.subr.mxu0 0.0
    %240 = vmatpush1.msra.mxu0 0.0
    %241 = vmatprep.subr.mxu0 0.0
    %242 = vmatpush1.msra.mxu0 0.0
    %243 = vmatprep.subr.mxu0 0.0
    %244 = vmatpush1.msra.mxu0 0.0
    %245 = vmatprep.subr.mxu0 0.0
    %246 = vmatpush1.msra.mxu0 0.0
    %247 = vmatprep.subr.mxu0 0.0
    %248 = vmatpush1.msra.mxu0 0.0
    %249 = vmatprep.subr.mxu0 0.0
    %250 = vmatpush1.msra.mxu0 0.0
    %251 = vmatprep.subr.mxu0 0.0
    %252 = vmatpush1.msra.mxu0 0.0
    %253 = vmatprep.subr.mxu0 0.0
    %254 = vmatpush1.msra.mxu0 0.0
    %255 = vmatprep.subr.mxu0 0.0
    %256 = vmatpush1.msra.mxu0 0.0
    %257 = vmatprep.subr.mxu0 0.0
    %258 = vmatpush1.msra.mxu0 0.0
    %259 = vmatprep.subr.mxu0 0.0
    %260 = vmatpush1.msra.mxu0 0.0
    %261 = vmatprep.subr.mxu0 0.0
    %262 = vmatpush1.msra.mxu0 0.0
    %263 = vmatprep.subr.mxu0 0.0
    %264 = vmatpush1.msra.mxu0 0.0
    %265 = vmatprep.subr.mxu0 0.0
    %266 = vmatpush1.msra.mxu0 0.0
    %267 = vmatprep.mubr.f32.mxu0 0.0
    %268 = vmatmul.mubr.f32.gmra.mrb[0].mxu0 %v80
    %v269 = vpop.f32.mrb[0].mxu0
    %v270 = vadd.f32 %v201, %v269
    %v271 = vpop.f32.mrb[0].mxu0
    %272 = vmatprep.mubr.f32.mxu0 0.0
    %273 = vmatmul.mubr.f32.gmra.mrb[0].mxu0 %v81
    %v274 = vpop.f32.mrb[0].mxu0
    %v275 = vadd.f32 %v201, %v274
    %v276 = vpop.f32.mrb[0].mxu0
    %277 = vdwg.mxu0
    %v278 = vmul.f32 %v270, 0.5
    %v279 = vmul.f32 %v275, 0.5
    %v280 = vmul.f32 %v270, 0.70710677
    %v281 = vmul.f32 %v275, 0.70710677
    %v282 = verf.f32.pop %v280
    %v283 = verf.f32.pop %v281
    %v284 = vadd.f32 %v282, 1.0
    %v285 = vadd.f32 %v283, 1.0
    %v286 = vmul.f32 %v278, %v284
    %v287 = vmul.f32 %v279, %v285
    %v288 = vmul.f32 %v188, %v286
    %v289 = vmul.f32 %v193, %v287
    %290 = vst [vmem:[#allocation8] sm:$0xff] %v288
    %291 = vst [vmem:[#allocation8 + $0x8] sm:$0xff] %v289
    // Predicated region
    $region34: #{tpu_custom_call.1} parent=1 // pred_check
      _
    $region35: #{tpu_custom_call.1} parent=1 // pred_check_branch
      %293 = sbr.rel (0) target = $region37
    $region36: #{tpu_custom_call.1} parent=1 // pred_region
      %s295 = ssub.s32 256, 256
      %296 = vsyncadd [#allocation4], %s295
      %s297 = sshll.u32 [#allocation8], 4
      %s298 = int_to_ptr.vmem [resolvable:$true] %s297
      %303 = dma.vmem_to_hbm [thread:$0]  %s298, 256, %s5, [#allocation4], 128, 128, 8
    $region37: #{tpu_custom_call.1} parent=1 // pred_fallthru
      _
    // Predicated region
    $region38: #{tpu_custom_call.1} parent=1 // pred_check
      _
    $region39: #{tpu_custom_call.1} parent=1 // pred_check_branch
      %305 = sbr.rel (0) target = $region41
    $region40: #{tpu_custom_call.1} parent=1 // pred_region
      %306 = dma.done [#allocation4], 256
    $region41: #{tpu_custom_call.1} parent=1 // pred_fallthru
      _
    %307 = vsyncpa [#allocation3], 1
    %308 = vsyncpa [#allocation6], 1
    %309 = vsyncpa [#allocation4], 1

</llo_original>
